<compile_context>
chip_gen: v6e
topology: v6e:2x2x1
jax: 0.10.0
libtpu: 0.0.40
codegen_flags: <defaults>
</compile_context>

<pallas_src>
import functools

import jax
import jax.numpy as jnp
from jax.experimental import pallas as pl
from jax.experimental.pallas import tpu as pltpu

LN_EPS = 1e-5       # torch.nn.LayerNorm default eps
HEAD_PAD = 128      # lane-dense padded width for the fused 4+8 head outputs


def _round_up(x, m):
    return ((x + m - 1) // m) * m


# ---------------------------------------------------------------------------
# Kernel 1: stand-in backbone  feats = x @ W_bb + b_bb, tiled over (F, K)
# ---------------------------------------------------------------------------
# TODO(synk): the real `model` backbone (e.g. MViT video encoder) and the
# optional lifting_net are external modules; they are replaced here by a
# deterministic linear projection to feat_dim.
def _backbone_kernel(x_ref, w_ref, b_ref, feats_ref):
    k = pl.program_id(1)

    # The output tile's index_map ignores k, so it stays VMEM-resident across
    # the reduction: use it directly as the f32 accumulator (no scratch).
    @pl.when(k == 0)
    def _():
        feats_ref[...] = jnp.zeros_like(feats_ref)

    # x arrives f32 (cast here, free VPU work) — avoids a separate HBM cast
    # pass; the weight is pre-cast bf16. MXU runs bf16 x bf16 -> f32.
    feats_ref[...] += jnp.dot(x_ref[...].astype(jnp.bfloat16), w_ref[...],
                              preferred_element_type=jnp.float32)

    @pl.when(k == pl.num_programs(1) - 1)
    def _():
        feats_ref[...] += b_ref[...]


# ---------------------------------------------------------------------------
# Kernel 2: view-max aggregation + inter trunk + fused fc_offence / fc_action
# ---------------------------------------------------------------------------
def _heads_kernel(B, V,
                  feats_ref,   # (B*V, F) f32
                  wi1_ref,     # (F, F)   bf16  (ln_inter affine folded in)
                  wi2_ref,     # (F, F)   bf16
                  wh1_ref,     # (F, 2F)  bf16  (both head lin1, LN affine folded)
                  wh2_ref,     # (2F, HEAD_PAD) bf16  (fused F->4 and F->8)
                  bias_ref,    # (4, 2F)  f32   rows: bi1, bi2, bh1, bh2(pad)
                  out_ref):    # (B, HEAD_PAD) f32
    F = feats_ref.shape[1]
    feats = feats_ref[...]                                   # (B*V, F)

    # agr_type='max': max over the view axis. Single vreg-scale tile, the
    # reshape + cross-sublane max is off the hot path.
    pooled = jnp.max(feats.reshape(B, V, F), axis=1)         # (B, F)

    bias = bias_ref[...]
    bi1 = bias[0:1, :F]
    bi2 = bias[1:2, :F]
    bh1 = bias[2:3, :]                                       # (1, 2F)
    bh2 = bias[3:4, :HEAD_PAD]                               # (1, 128)

    def ln(t):   # affine is folded into the following Linear weights
        m = jnp.mean(t, axis=-1, keepdims=True)
        c = t - m
        v = jnp.mean(c * c, axis=-1, keepdims=True)
        return c * jax.lax.rsqrt(v + LN_EPS)

    # ---- inter: LayerNorm -> Linear -> Linear (bf16 MXU, f32 accum) --------
    h = ln(pooled)
    h = jnp.dot(h.astype(jnp.bfloat16), wi1_ref[...],
                preferred_element_type=jnp.float32) + bi1
    inter = jnp.dot(h.astype(jnp.bfloat16), wi2_ref[...],
                    preferred_element_type=jnp.float32) + bi2

    # ---- heads: ONE shared LayerNorm statistic (exact: same input/eps),
    # both F x F projections fused into one (F, 2F) matmul -------------------
    xh = ln(inter)
    hb = jnp.dot(xh.astype(jnp.bfloat16), wh1_ref[...],
                 preferred_element_type=jnp.float32) + bh1   # (B, 2F) = [ho | ha]

    # ---- fused final projections (F->4 and F->8) in ONE lane-dense matmul:
    # wh2 rows [0:F, 0:4] = wo2, rows [F:2F, 4:12] = wa2, zeros elsewhere ----
    out_ref[...] = jnp.dot(hb.astype(jnp.bfloat16), wh2_ref[...],
                           preferred_element_type=jnp.float32) + bh2


# ---------------------------------------------------------------------------
# Parameters (ordered list matches the torch module's layers; f32, torch-like)
# ---------------------------------------------------------------------------
def make_params(key, in_dim, feat_dim):
    ks = jax.random.split(key, 16)
    s = 0.02

    def w(k, shape):
        return (s * jax.random.normal(k, shape)).astype(jnp.float32)

    return [
        w(ks[0], (in_dim, feat_dim)),                 # w_bb
        w(ks[1], (1, feat_dim)),                      # b_bb
        jnp.ones((1, feat_dim), jnp.float32),         # ln_inter gamma
        jnp.zeros((1, feat_dim), jnp.float32),        # ln_inter beta
        w(ks[2], (feat_dim, feat_dim)),               # inter lin1 W
        w(ks[3], (1, feat_dim)),                      # inter lin1 b
        w(ks[4], (feat_dim, feat_dim)),               # inter lin2 W
        w(ks[5], (1, feat_dim)),                      # inter lin2 b
        jnp.ones((1, feat_dim), jnp.float32),         # ln_offence gamma
        jnp.zeros((1, feat_dim), jnp.float32),        # ln_offence beta
        w(ks[6], (feat_dim, feat_dim)),               # offence lin1 W
        w(ks[7], (1, feat_dim)),                      # offence lin1 b
        w(ks[8], (feat_dim, 4)),                      # offence lin2 W
        w(ks[9], (1, 4)),                             # offence lin2 b
        jnp.ones((1, feat_dim), jnp.float32),         # ln_action gamma
        jnp.zeros((1, feat_dim), jnp.float32),        # ln_action beta
        w(ks[10], (feat_dim, feat_dim)),              # action lin1 W
        w(ks[11], (1, feat_dim)),                     # action lin1 b
        w(ks[12], (feat_dim, 8)),                     # action lin2 W
        w(ks[13], (1, 8)),                            # action lin2 b
    ]


# ---------------------------------------------------------------------------
# One-time parameter preparation (OFF the forward hot path)
# ---------------------------------------------------------------------------
def prepare_params(params, in_dim, feat_dim):
    (w_bb, b_bb,
     gi, bti, wi1, bi1, wi2, bi2,
     go, bto, wo1, bo1, wo2, bo2,
     ga, bta, wa1, ba1, wa2, ba2) = params
    F = feat_dim

    # Pad the reduction axis once (zeros contribute nothing) and store bf16.
    d_pad = _round_up(in_dim, 128)
    w_bb_p = w_bb if d_pad == in_dim else jnp.pad(w_bb, ((0, d_pad - in_dim), (0, 0)))
    w_bb_bf = w_bb_p.astype(jnp.bfloat16)

    # Fold LayerNorm affine into the following Linear (mathematically exact):
    #   (x*g + b) @ W + c  ==  x @ (g^T * W) + (b @ W + c)
    def fold(g, b, W, c):
        return g.reshape(F, 1) * W, b @ W + c

    wi1_f, bi1_f = fold(gi, bti, wi1, bi1)
    wo1_f, bo1_f = fold(go, bto, wo1, bo1)
    wa1_f, ba1_f = fold(ga, bta, wa1, ba1)

    # Fuse the two head F x F projections: (F, 2F) / (1, 2F).
    wh1 = jnp.concatenate([wo1_f, wa1_f], axis=1)
    bh1 = jnp.concatenate([bo1_f, ba1_f], axis=1)

    # Fuse the two tiny final projections into one lane-dense (2F, 128) weight.
    wh2 = jnp.zeros((2 * F, HEAD_PAD), jnp.float32)
    wh2 = wh2.at[:F, 0:4].set(wo2).at[F:, 4:12].set(wa2)
    bh2 = jnp.zeros((1, HEAD_PAD), jnp.float32)
    bh2 = bh2.at[:, 0:4].set(bo2).at[:, 4:12].set(ba2)

    # Collapse the small bias vectors into one (4, 2F) array (single DMA).
    w2 = 2 * F
    bias_rows = jnp.zeros((4, w2), jnp.float32)
    bias_rows = bias_rows.at[0, :F].set(bi1_f[0])
    bias_rows = bias_rows.at[1, :F].set(bi2[0])
    bias_rows = bias_rows.at[2, :].set(bh1[0])
    bias_rows = bias_rows.at[3, :HEAD_PAD].set(bh2[0])

    return dict(
        d_pad=d_pad,
        w_bb=w_bb_bf,                         # (d_pad, F) bf16
        b_bb=b_bb,                            # (1, F) f32
        wi1=wi1_f.astype(jnp.bfloat16),       # (F, F) bf16
        wi2=wi2.astype(jnp.bfloat16),         # (F, F) bf16
        wh1=wh1.astype(jnp.bfloat16),         # (F, 2F) bf16
        wh2=wh2.astype(jnp.bfloat16),         # (2F, 128) bf16
        bias=bias_rows,                       # (4, 2F) f32
    )


# ---------------------------------------------------------------------------
# Wrapper (forward)
# ---------------------------------------------------------------------------
def mv_aggregate(mvimages, prepped, feat_dim):
    B, V, C, T, H, W = mvimages.shape
    D = C * T * H * W
    M = B * V
    F = feat_dim
    # TODO(synk): the real model uses feat_dim=400; supporting it needs F
    # padded to 512 plus masked LayerNorm statistics (sum over the real F).
    assert F % 128 == 0, "feat_dim must be lane-aligned (multiple of 128)"
    d_pad = prepped["d_pad"]

    x = mvimages.reshape(M, D).astype(jnp.float32)
    if d_pad != D:
        x = jnp.pad(x, ((0, 0), (0, d_pad - D)))

    # F-tile: keep >=2 blocks on the "parallel" axis whenever F allows so v7x's
    # two TensorCores both get work; tf=256 once F >= 512 for bigger DMAs.
    if F % 256 == 0 and F >= 512:
        tf = 256
    else:
        tf = 128 if F >= 256 else F
    nf = F // tf
    # TODO(synk): when nf == 1 (feat_dim == 128) the parallel axis has a single
    # block and v7x's second TensorCore idles; a K-split with partial sums
    # would be needed to use it.

    # K-tile: full K in one step when it fits (<= 8192), else the largest
    # power-of-two tile (<= 8192) dividing the padded K — amortizes the
    # ~0.35 us per-grid-step overhead. VMEM worst case (tk=8192, tf=256):
    # bf16 W tile 4 MiB (x2 buffers) + f32 x tile — well under the 32 MiB
    # scoped limit (works on v5e/v6e's 128 MiB and v7x's 64 MiB VMEM alike).
    if d_pad <= 8192:
        tk = d_pad
    else:
        tk = next(t for t in (8192, 4096, 2048, 1024, 512, 256, 128)
                  if d_pad % t == 0)
    nk = d_pad // tk

    # NOTE: if B*V grows, keep M a multiple of 8 (f32) / 16 (bf16 packing).
    feats = pl.pallas_call(
        _backbone_kernel,
        out_shape=jax.ShapeDtypeStruct((M, F), jnp.float32),
        grid_spec=pltpu.PrefetchScalarGridSpec(
            num_scalar_prefetch=0,
            grid=(nf, nk),                       # F parallel, K reduction last
            in_specs=[
                pl.BlockSpec((M, tk), lambda j, k: (0, k)),     # x (f32)
                pl.BlockSpec((tk, tf), lambda j, k: (k, j)),    # w_bb (bf16)
                pl.BlockSpec((1, tf), lambda j, k: (0, j)),     # b_bb (f32)
            ],
            out_specs=pl.BlockSpec((M, tf), lambda j, k: (0, j)),
        ),
        compiler_params=pltpu.CompilerParams(
            dimension_semantics=("parallel", "arbitrary"),
            vmem_limit_bytes=32 * 1024 * 1024,
        ),
        cost_estimate=pl.CostEstimate(
            flops=2 * M * d_pad * F,
            transcendentals=0,
            # x (f32) is re-streamed once per F-tile; weight streams once (bf16)
            bytes_accessed=4 * M * d_pad * nf + 2 * d_pad * F + 4 * F + 4 * M * F,
        ),
    )(x, prepped["w_bb"], prepped["b_bb"])

    vmem = pl.BlockSpec(memory_space=pltpu.MemorySpace.VMEM)
    head_args = [feats, prepped["wi1"], prepped["wi2"],
                 prepped["wh1"], prepped["wh2"], prepped["bias"]]

    slab = pl.pallas_call(
        functools.partial(_heads_kernel, B, V),
        out_shape=jax.ShapeDtypeStruct((B, HEAD_PAD), jnp.float32),
        in_specs=[vmem] * len(head_args),
        out_specs=vmem,
        compiler_params=pltpu.CompilerParams(
            vmem_limit_bytes=32 * 1024 * 1024),
    )(*head_args)

    off = slab[:, 0:4]                  # pred_offence_severity (B, 4)
    act = slab[:, 4:12]                 # pred_action           (B, 8)
    attn = feats.reshape(B, V, F)       # attention aux for agr_type='max'

    # Match MVAggregate.forward return order.
    return off, act, attn


# ---------------------------------------------------------------------------
# Pure-JAX reference (mirrors the kernels' bf16-MXU / f32-accum policy, but
# keeps the torch op order: unfused LayerNorm affine, separate head matmuls)
# ---------------------------------------------------------------------------
def reference(mvimages, params, feat_dim):
    (w_bb, b_bb,
     gi, bti, wi1, bi1, wi2, bi2,
     go, bto, wo1, bo1, wo2, bo2,
     ga, bta, wa1, ba1, wa2, ba2) = params
    B, V = mvimages.shape[:2]
    x = mvimages.reshape(B * V, -1).astype(jnp.float32)

    def ln(t, g, b):
        m = jnp.mean(t, axis=-1, keepdims=True)
        v = jnp.mean((t - m) ** 2, axis=-1, keepdims=True)
        return (t - m) / jnp.sqrt(v + LN_EPS) * g + b

    def bdot(a, w):
        return jnp.dot(a.astype(jnp.bfloat16), w.astype(jnp.bfloat16),
                       preferred_element_type=jnp.float32)

    feats = bdot(x, w_bb) + b_bb
    aux = feats.reshape(B, V, feat_dim)
    pooled = aux.max(axis=1)
    h = bdot(ln(pooled, gi, bti), wi1) + bi1
    inter = bdot(h, wi2) + bi2
    ho = bdot(ln(inter, go, bto), wo1) + bo1
    ha = bdot(ln(inter, ga, bta), wa1) + ba1
    off = bdot(ho, wo2) + bo2
    act = bdot(ha, wa2) + ba2
    return off, act, aux


if __name__ == "__main__":
    # Small shapes: 2 clips, 4 views, 3 channels, 4 frames, 8x8 spatial,
    # feat_dim=256 (lane-aligned stand-in for the module's default 400; also
    # exercises the 2-block parallel F axis).
    B, V, C, T, H, W = 2, 4, 3, 4, 8, 8
    FEAT_DIM = 256
    D = C * T * H * W

    key = jax.random.PRNGKey(0)
    k_x, k_p = jax.random.split(key)
    mvimages = jax.random.normal(k_x, (B, V, C, T, H, W), dtype=jnp.float32)
    params = make_params(k_p, D, FEAT_DIM)
    prepped = prepare_params(params, D, FEAT_DIM)   # one-time, off the hot path

    off, act, attn = mv_aggregate(mvimages, prepped, FEAT_DIM)
    jax.block_until_ready((off, act, attn))

    off_r, act_r, attn_r = reference(mvimages, params, FEAT_DIM)
    assert off.shape == (B, 4) and act.shape == (B, 8) and attn.shape == (B, V, FEAT_DIM)
    assert jnp.allclose(attn, attn_r, atol=2e-3, rtol=2e-3)
    assert jnp.allclose(off, off_r, atol=2e-3, rtol=2e-3)
    assert jnp.allclose(act, act_r, atol=2e-3, rtol=2e-3)

    print("KERNEL_OK")
</pallas_src>

<mosaic_0001>
module attributes {stable_mosaic.version = 11 : i64} {
  func.func @_backbone_kernel(%arg0: i32, %arg1: i32, %arg2: memref<8x768xf32, #tpu.memory_space<vmem>>, %arg3: memref<768x128xbf16, #tpu.memory_space<vmem>>, %arg4: memref<1x128xf32, #tpu.memory_space<vmem>>, %arg5: memref<8x128xf32, #tpu.memory_space<vmem>>) attributes {dimension_semantics = [#tpu.dimension_semantics<parallel>, #tpu.dimension_semantics<arbitrary>], iteration_bounds = array<i64: 2, 1>, scalar_prefetch = 0 : i64, scratch_operands = 0 : i64, tpu.core_type = #tpu.core_type<tc>, window_params = [{transform_indices = @transform_0, window_bounds = array<i64: 8, 768>}, {transform_indices = @transform_1, window_bounds = array<i64: 768, 128>}, {transform_indices = @transform_2, window_bounds = array<i64: 1, 128>}, {transform_indices = @transform_3, window_bounds = array<i64: 8, 128>}]} {
    %c0_i32 = arith.constant 0 : i32
    %0 = arith.cmpi eq, %arg1, %c0_i32 : i32
    %1 = arith.extui %0 : i1 to i32
    %c0_i32_0 = arith.constant 0 : i32
    %2 = arith.cmpi ne, %1, %c0_i32_0 : i32
    scf.if %2 {
      %cst_10 = arith.constant 0.000000e+00 : f32
      %13 = vector.broadcast %cst_10 : f32 to vector<8x128xf32>
      %c0_11 = arith.constant 0 : index
      %c0_12 = arith.constant 0 : index
      %14 = vector.load %arg5[%c0_11, %c0_12] : memref<8x128xf32, #tpu.memory_space<vmem>>, vector<8x128xf32>
      tpu.vector_store %arg5[%c0_11, %c0_12], %13 {strides = array<i32>} : memref<8x128xf32, #tpu.memory_space<vmem>>, vector<8x128xf32>,
    } else {
    }
    %c0 = arith.constant 0 : index
    %c0_1 = arith.constant 0 : index
    %3 = vector.load %arg5[%c0, %c0_1] : memref<8x128xf32, #tpu.memory_space<vmem>>, vector<8x128xf32>
    %c0_2 = arith.constant 0 : index
    %c0_3 = arith.constant 0 : index
    %4 = vector.load %arg2[%c0_2, %c0_3] : memref<8x768xf32, #tpu.memory_space<vmem>>, vector<8x768xf32>
    %5 = arith.truncf %4 : vector<8x768xf32> to vector<8x768xbf16>
    %c0_4 = arith.constant 0 : index
    %c0_5 = arith.constant 0 : index
    %6 = vector.load %arg3[%c0_4, %c0_5] : memref<768x128xbf16, #tpu.memory_space<vmem>>, vector<768x128xbf16>
    %cst = arith.constant dense<0.000000e+00> : vector<8x128xf32>
    %7 = tpu.matmul %5, %6, %cst {dimension_numbers = #tpu.dot_dimension_numbers<[1], [0], [0], [1], [0, 0, 1, 1], [], []>} : vector<8x768xbf16>, vector<768x128xbf16>, vector<8x128xf32> -> vector<8x128xf32>
    %8 = arith.addf %3, %7 : vector<8x128xf32>
    %c0_6 = arith.constant 0 : index
    %c0_7 = arith.constant 0 : index
    %9 = vector.load %arg5[%c0_6, %c0_7] : memref<8x128xf32, #tpu.memory_space<vmem>>, vector<8x128xf32>
    tpu.vector_store %arg5[%c0_6, %c0_7], %8 {strides = array<i32>} : memref<8x128xf32, #tpu.memory_space<vmem>>, vector<8x128xf32>,
    %c0_i32_8 = arith.constant 0 : i32
    %10 = arith.cmpi eq, %arg1, %c0_i32_8 : i32
    %11 = arith.extui %10 : i1 to i32
    %c0_i32_9 = arith.constant 0 : i32
    %12 = arith.cmpi ne, %11, %c0_i32_9 : i32
    scf.if %12 {
      %c0_10 = arith.constant 0 : index
      %c0_11 = arith.constant 0 : index
      %13 = vector.load %arg5[%c0_10, %c0_11] : memref<8x128xf32, #tpu.memory_space<vmem>>, vector<8x128xf32>
      %c0_12 = arith.constant 0 : index
      %c0_13 = arith.constant 0 : index
      %14 = vector.load %arg4[%c0_12, %c0_13] : memref<1x128xf32, #tpu.memory_space<vmem>>, vector<1x128xf32>
      %15 = vector.broadcast %14 : vector<1x128xf32> to vector<8x128xf32>
      %16 = arith.addf %13, %15 : vector<8x128xf32>
      %c0_14 = arith.constant 0 : index
      %c0_15 = arith.constant 0 : index
      %17 = vector.load %arg5[%c0_14, %c0_15] : memref<8x128xf32, #tpu.memory_space<vmem>>, vector<8x128xf32>
      tpu.vector_store %arg5[%c0_14, %c0_15], %16 {strides = array<i32>} : memref<8x128xf32, #tpu.memory_space<vmem>>, vector<8x128xf32>,
    } else {
    }
    return
  }
  func.func @transform_0(%arg0: i32, %arg1: i32) -> (i32, i32) {
    %c0_i32 = arith.constant 0 : i32
    %c0_i32_0 = arith.constant 0 : i32
    return %c0_i32, %arg1 : i32, i32
  }
  func.func @transform_1(%arg0: i32, %arg1: i32) -> (i32, i32) {
    %c0_i32 = arith.constant 0 : i32
    return %arg1, %arg0 : i32, i32
  }
  func.func @transform_2(%arg0: i32, %arg1: i32) -> (i32, i32) {
    %c0_i32 = arith.constant 0 : i32
    %c0_i32_0 = arith.constant 0 : i32
    return %c0_i32, %arg0 : i32, i32
  }
  func.func @transform_3(%arg0: i32, %arg1: i32) -> (i32, i32) {
    %c0_i32 = arith.constant 0 : i32
    %c0_i32_0 = arith.constant 0 : i32
    return %c0_i32, %arg0 : i32, i32
  }
}

</mosaic_0001>

<llo_original>
// kernel: tpu_custom_call.1
$region0: #{tpu_custom_call.1}
  #allocation0 [shape = 'u32[]', space=smem, size = 0x4, offset = 0x4, fixed_abs, tag = 'smem constant byte address 0x4 - core index']
  #allocation1 [shape = 'u32[144,128]{1,0:T(1,128)}', space=vmem, size = 0x12000, scoped, tag = 'internal scratch']
  %s0 = inlined_call_operand.hbm [shape: f32[8,768], index: 0, kind: input, shape index: {}]
  %s1 = inlined_call_operand.hbm [shape: bf16[768,256], index: 1, kind: input, shape index: {}]
  %s2 = inlined_call_operand.vmem [shape: f32[1,256], index: 2, kind: input, shape index: {}]
  %s3 = inlined_call_operand.hbm [shape: f32[8,256], index: 3, kind: output, shape index: {}]
  %s4 = sld [smem:[#allocation0]]
  $region61: #{tpu_custom_call.1} parent=0
    _
  %s6 = ssub.s32 1, %s4
  %s7 = scalar_select 0, %s6, %s4
  $region1: #{tpu_custom_call.1} parent=0
    #allocation2 [shape = 'u8[24576]{0}', space=vmem, size = 0x6000, scoped, tag = 'input window, operand 0, single buffered']
    #allocation3 [shape = 's32[2]{0}', space=sflag, size = 0x8, scoped, tag = 'scoped memory for tpu_custom_call.1']
    #allocation4 [shape = 's32[2]{0}', space=sflag, size = 0x8, scoped, tag = 'scoped memory for tpu_custom_call.1']
    #allocation5 [shape = 'u8[393216]{0}', space=vmem, size = 0x60000, scoped, tag = 'input window, operand 1']
    #allocation6 [shape = 's32[2]{0}', space=sflag, size = 0x8, scoped, tag = 'scoped memory for tpu_custom_call.1']
    #allocation7 [shape = 'u8[8192]{0}', space=vmem, size = 0x2000, scoped, tag = 'output window, operand 0']
    %8 = vsyncpa [#allocation3], 0
    %9 = vsyncpa [#allocation6], 0
    %s10 = scalar_lea.sflag [#allocation6], 1
    %11 = vsyncpa %s10, 0
    %12 = vsyncpa [#allocation4], 0
    %s13 = scalar_lea.sflag [#allocation4], 1
    %14 = vsyncpa %s13, 0
    loop: start=0, step=1, limit=4
    $region2: #{tpu_custom_call.1} parent=1 // loop_pre_header
      _
    $region3: #{tpu_custom_call.1} parent=1 // loop_header
      %s16 = sphi 0, %s20
      %p17 = scmp.ge.s32.totalorder %s16, 4
      %s23 = sphi 0, %s35
      %s24 = sphi 0, %s31
      %s25 = sphi 0, %s23
      %s26 = sphi 0, %s24
      %s27 = sphi 0, %s25
      %s28 = sphi 0, %s26
      %s38 = sphi 0, %s40
      %s41 = sphi 0, %s38
      %s42 = sphi 0, %s41
      %s58 = sphi 0, %s42
      %s66 = sphi 0, %s68
      %s69 = sphi 0, %s66
      %s70 = sphi 0, %s69
      %s86 = sphi 0, %s70
      %s92 = sphi 0, %s94
      %s95 = sphi 0, %s92
      %s96 = sphi 0, %s95
      %s112 = sphi 0, %s96
      %s118 = sphi 0, %s120
      %s121 = sphi 0, %s118
      %s122 = sphi 0, %s121
      %s138 = sphi 0, %s122
    $region4: #{tpu_custom_call.1} parent=1 // loop_header_branch
      %19 = sbr.rel (%p17) target = $region8
    $region5: #{tpu_custom_call.1} parent=1 // loop_body
      %s21 = ssub.s32 %s16, 1
      %s22 = ssub.s32 %s16, 2
      %s29 = sadd.s32 1, %s24
      %p30 = scmp.ge.s32.totalorder %s29, 1
      %s31 = scalar_select %p30, 0, %s29
      %s32 = sadd.s32 1, %s23
      %s33 = scalar_select %p30, %s32, %s23
      %p34 = scmp.ge.s32.totalorder %s33, 2
      %s35 = scalar_select %p34, 0, %s33
      %s36 = ssub.s32 %s24, %s31
      %p37 = scmp.eq.s32.totalorder %s36, 0
      %s39 = sadd.s32 %s38, 1
      %s40 = scalar_select %p37, %s38, %s39
      %p43 = pneg %p37
      %p44 = scmp.eq.s32.totalorder %s16, 1
      %p45 = por %p43, %p44
      %p46 = scmp.ne.s32.totalorder %s38, %s41
      %p47 = scmp.eq.s32.totalorder %s16, 0
      %p48 = por %p46, %p47
      %p49 = scmp.ne.s32.totalorder %s38, %s41
      %p50 = scmp.eq.s32.totalorder %s21, 1
      %p51 = por %p49, %p50
      %p52 = scmp.ne.s32.totalorder %s41, %s42
      %p53 = scmp.eq.s32.totalorder %s21, 0
      %p54 = por %p52, %p53
      %p55 = scmp.ne.s32.totalorder %s41, %s42
      %p56 = scmp.eq.s32.totalorder %s22, 1
      %p57 = por %p55, %p56
      %p59 = scmp.ne.s32.totalorder %s42, %s58
      %p60 = scmp.eq.s32.totalorder %s22, 0
      %p61 = por %p59, %p60
      %s62 = ssub.s32 %s24, %s31
      %s63 = ssub.s32 %s23, %s35
      %s64 = sor.u32 %s62, %s63
      %p65 = scmp.eq.s32.totalorder %s64, 0
      %s67 = sadd.s32 %s66, 1
      %s68 = scalar_select %p65, %s66, %s67
      %p71 = pneg %p65
      %p72 = scmp.eq.s32.totalorder %s16, 1
      %p73 = por %p71, %p72
      %p74 = scmp.ne.s32.totalorder %s66, %s69
      %p75 = scmp.eq.s32.totalorder %s16, 0
      %p76 = por %p74, %p75
      %p77 = scmp.ne.s32.totalorder %s66, %s69
      %p78 = scmp.eq.s32.totalorder %s21, 1
      %p79 = por %p77, %p78
      %p80 = scmp.ne.s32.totalorder %s69, %s70
      %p81 = scmp.eq.s32.totalorder %s21, 0
      %p82 = por %p80, %p81
      %p83 = scmp.ne.s32.totalorder %s69, %s70
      %p84 = scmp.eq.s32.totalorder %s22, 1
      %p85 = por %p83, %p84
      %p87 = scmp.ne.s32.totalorder %s70, %s86
      %p88 = scmp.eq.s32.totalorder %s22, 0
      %p89 = por %p87, %p88
      %s90 = ssub.s32 %s23, %s35
      %p91 = scmp.eq.s32.totalorder %s90, 0
      %s93 = sadd.s32 %s92, 1
      %s94 = scalar_select %p91, %s92, %s93
      %p97 = pneg %p91
      %p98 = scmp.eq.s32.totalorder %s16, 1
      %p99 = por %p97, %p98
      %p100 = scmp.ne.s32.totalorder %s92, %s95
      %p101 = scmp.eq.s32.totalorder %s16, 0
      %p102 = por %p100, %p101
      %p103 = scmp.ne.s32.totalorder %s92, %s95
      %p104 = scmp.eq.s32.totalorder %s21, 1
      %p105 = por %p103, %p104
      %p106 = scmp.ne.s32.totalorder %s95, %s96
      %p107 = scmp.eq.s32.totalorder %s21, 0
      %p108 = por %p106, %p107
      %p109 = scmp.ne.s32.totalorder %s95, %s96
      %p110 = scmp.eq.s32.totalorder %s22, 1
      %p111 = por %p109, %p110
      %p113 = scmp.ne.s32.totalorder %s96, %s112
      %p114 = scmp.eq.s32.totalorder %s22, 0
      %p115 = por %p113, %p114
      %s116 = ssub.s32 %s23, %s35
      %p117 = scmp.eq.s32.totalorder %s116, 0
      %s119 = sadd.s32 %s118, 1
      %s120 = scalar_select %p117, %s118, %s119
      %p123 = pneg %p117
      %p124 = scmp.eq.s32.totalorder %s16, 1
      %p125 = por %p123, %p124
      %p126 = scmp.ne.s32.totalorder %s118, %s121
      %p127 = scmp.eq.s32.totalorder %s16, 0
      %p128 = por %p126, %p127
      %p129 = scmp.ne.s32.totalorder %s118, %s121
      %p130 = scmp.eq.s32.totalorder %s21, 1
      %p131 = por %p129, %p130
      %p132 = scmp.ne.s32.totalorder %s121, %s122
      %p133 = scmp.eq.s32.totalorder %s21, 0
      %p134 = por %p132, %p133
      %p135 = scmp.ne.s32.totalorder %s121, %s122
      %p136 = scmp.eq.s32.totalorder %s22, 1
      %p137 = por %p135, %p136
      %p139 = scmp.ne.s32.totalorder %s122, %s138
      %p140 = scmp.eq.s32.totalorder %s22, 0
      %p141 = por %p139, %p140
      %p142 = scmp.le.s32.totalorder 1, %s16
      %p143 = scmp.lt.s32.totalorder %s16, 3
      %p144 = pnand %p142, %p143
      %p145 = pneg %p144
      // Predicated region
      $region9: #{tpu_custom_call.1} parent=5 // pred_check
        _
      $region10: #{tpu_custom_call.1} parent=5 // pred_check_branch
        %147 = sbr.rel (%p144) target = $region12
      $region11: #{tpu_custom_call.1} parent=5 // pred_region
        %s148 = ssub.s32 %s16, 1
        // Predicated region
        $region13: #{tpu_custom_call.1} parent=11 // pred_check
          %p149 = pneg %p54
        $region14: #{tpu_custom_call.1} parent=11 // pred_check_branch
          %151 = sbr.rel (%p149) target = $region16
        $region15: #{tpu_custom_call.1} parent=11 // pred_region
          %s152 = smul.u32 6, %s26
          %s154 = ssub.s32 768, 768
          %155 = vsyncadd [#allocation3], %s154
          %s156 = smul.addr %s152, 128
          %s157 = scalar_lea.hbm %s0, %s156
          %s159 = sshll.u32 [#allocation2], 4
          %s160 = int_to_ptr.vmem [resolvable:$true] %s159
          %162 = dma.hbm_to_vmem [thread:$0]  %s157, 768, %s160, [#allocation3]
        $region16: #{tpu_custom_call.1} parent=11 // pred_fallthru
          _
      $region12: #{tpu_custom_call.1} parent=5 // pred_fallthru
        _
      %p163 = scmp.lt.s32.totalorder %s16, 2
      // Predicated region
      $region17: #{tpu_custom_call.1} parent=5 // pred_check
        %p164 = pneg %p163
      $region18: #{tpu_custom_call.1} parent=5 // pred_check_branch
        %166 = sbr.rel (%p164) target = $region20
      $region19: #{tpu_custom_call.1} parent=5 // pred_region
        // Predicated region
        $region21: #{tpu_custom_call.1} parent=19 // pred_check
          %p167 = pneg %p76
        $region22: #{tpu_custom_call.1} parent=19 // pred_check_branch
          %169 = sbr.rel (%p167) target = $region24
        $region23: #{tpu_custom_call.1} parent=19 // pred_region
          %s170 = sand.u32 %s66, 1
          %s171 = scalar_lea.sflag [#allocation6], %s170
          %s172 = sand.u32 %s66, 1
          %s173 = smul.addr %s172, 384
          %s174 = scalar_lea.vmem [#allocation5], %s173
          %s175 = smul.u32 96, %s24
          %s177 = ssub.s32 6144, 6144
          %178 = vsyncadd %s171, %s177
          %s179 = smul.addr %s175, 2
          %s180 = sadd.s32 %s23, %s179
          %s181 = smul.addr %s180, 64
          %s182 = scalar_lea.hbm %s1, %s181
          %s183 = sshll.u32 %s174, 4
          %s184 = int_to_ptr.vmem [resolvable:$true] %s183
          %189 = dma.hbm_to_vmem [thread:$0]  %s182, 6144, %s184, %s171, 128, 64, 4
        $region24: #{tpu_custom_call.1} parent=19 // pred_fallthru
          _
        // Predicated region
        $region25: #{tpu_custom_call.1} parent=19 // pred_check
          %p190 = pneg %p102
        $region26: #{tpu_custom_call.1} parent=19 // pred_check_branch
          %192 = sbr.rel (%p190) target = $region28
        $region27: #{tpu_custom_call.1} parent=19 // pred_region
          %p193 = scmp.lt.s32.totalorder %s23, 1
          %s194 = scalar_select %p193, %s23, 1
          %s195 = scalar_lea.vmem %s2, %s194
        $region28: #{tpu_custom_call.1} parent=19 // pred_fallthru
          _
      $region20: #{tpu_custom_call.1} parent=5 // pred_fallthru
        _
      %p196 = scmp.le.s32.totalorder 1, %s16
      %p197 = scmp.lt.s32.totalorder %s16, 3
      %p198 = pnand %p196, %p197
      %p199 = pneg %p198
      // Predicated region
      $region29: #{tpu_custom_call.1} parent=5 // pred_check
        _
      $region30: #{tpu_custom_call.1} parent=5 // pred_check_branch
        %201 = sbr.rel (%p198) target = $region32
      $region31: #{tpu_custom_call.1} parent=5 // pred_region
        %s202 = ssub.s32 %s16, 1
        // Predicated region
        $region33: #{tpu_custom_call.1} parent=31 // pred_check
          %p203 = pneg %p54
        $region34: #{tpu_custom_call.1} parent=31 // pred_check_branch
          %205 = sbr.rel (%p203) target = $region36
        $region35: #{tpu_custom_call.1} parent=31 // pred_region
          %206 = dma.done [#allocation3], 768
        $region36: #{tpu_custom_call.1} parent=31 // pred_fallthru
          _
        %s207 = sand.u32 %s69, 1
        %s208 = scalar_lea.sflag [#allocation6], %s207
        %s209 = sand.u32 %s69, 1
        %s210 = smul.addr %s209, 384
        %s211 = scalar_lea.vmem [#allocation5], %s210
        // Predicated region
        $region37: #{tpu_custom_call.1} parent=31 // pred_check
          %p212 = pneg %p82
        $region38: #{tpu_custom_call.1} parent=31 // pred_check_branch
          %214 = sbr.rel (%p212) target = $region40
        $region39: #{tpu_custom_call.1} parent=31 // pred_region
          %215 = dma.done %s208, 6144
        $region40: #{tpu_custom_call.1} parent=31 // pred_fallthru
          _
        %p216 = pneg %p54
        %p217 = pneg %p51
        %s218 = sand.u32 %s69, 1
        %s219 = scalar_lea.sflag [#allocation6], %s218
        %s220 = sand.u32 %s69, 1
        %s221 = smul.addr %s220, 384
        %s222 = scalar_lea.vmem [#allocation5], %s221
        %p223 = pneg %p82
        %p224 = pneg %p79
        %p225 = scmp.lt.s32.totalorder %s25, 1
        %s226 = scalar_select %p225, %s25, 1
        %s227 = scalar_lea.vmem %s2, %s226
        %p228 = pneg %p108
        %p229 = pneg %p105
        %p230 = pneg %p134
        %p231 = pneg %p131
        %s232 = sand.u32 %s121, 1
        %s233 = scalar_lea.sflag [#allocation4], %s232
        %s234 = sand.u32 %s121, 1
        %s235 = smul.addr %s234, 8
        %s236 = scalar_lea.vmem [#allocation7], %s235
        %s237 = smul.u32 6, %s26
        %s238 = smul.u32 96, %s26
        %p239 = scmp.lt.s32.totalorder %s25, 1
        %s240 = scalar_select %p239, %s25, 1
        %s241 = scalar_lea.vmem %s2, %s240
        %p243 = scmp.eq.s32.totalorder %s26, 0
        // Predicated region
        $region41: #{tpu_custom_call.1} parent=31 // pred_check
          %p244 = pneg %p243
        $region42: #{tpu_custom_call.1} parent=31 // pred_check_branch
          %246 = sbr.rel (%p244) target = $region44
        $region43: #{tpu_custom_call.1} parent=31 // pred_region
          %247 = vst [vmem:[%s236] sm:$0xff] 0.0
        $region44: #{tpu_custom_call.1} parent=31 // pred_fallthru
          _
        %v248 = vld [vmem:[%s236] sm:$0xff]
        %v249 = vld [vmem:[#allocation2] sm:$0xff]
        %v250 = vld [vmem:[#allocation2 + $0x8] sm:$0xff]
        %v251 = vld [vmem:[#allocation2 + $0x10] sm:$0xff]
        %v252 = vld [vmem:[#allocation2 + $0x18] sm:$0xff]
        %v253 = vld [vmem:[#allocation2 + $0x20] sm:$0xff]
        %v254 = vld [vmem:[#allocation2 + $0x28] sm:$0xff]
        %v255 = vpack.c.bf16 %v249, %v249
        %v256 = vpack.c.bf16 %v250, %v250
        %v257 = vpack.c.bf16 %v251, %v251
        %v258 = vpack.c.bf16 %v252, %v252
        %v259 = vpack.c.bf16 %v253, %v253
        %v260 = vpack.c.bf16 %v254, %v254
        %v261 = vld [vmem:[%s211] sm:$0xf]
        %v262 = vld [vmem:[%s211 + $0x4] sm:$0xf]
        %v263 = vld [vmem:[%s211 + $0x8] sm:$0xf]
        %v264 = vld [vmem:[%s211 + $0xc] sm:$0xf]
        %v265 = vld [vmem:[%s211 + $0x10] sm:$0xf]
        %v266 = vld [vmem:[%s211 + $0x14] sm:$0xf]
        %v267 = vld [vmem:[%s211 + $0x18] sm:$0xf]
        %v268 = vld [vmem:[%s211 + $0x1c] sm:$0xf]
        %v269 = vld [vmem:[%s211 + $0x20] sm:$0xf]
        %v270 = vld [vmem:[%s211 + $0x24] sm:$0xf]
        %v271 = vld [vmem:[%s211 + $0x28] sm:$0xf]
        %v272 = vld [vmem:[%s211 + $0x2c] sm:$0xf]
        %v273 = vld [vmem:[%s211 + $0x30] sm:$0xf]
        %v274 = vld [vmem:[%s211 + $0x34] sm:$0xf]
        %v275 = vld [vmem:[%s211 + $0x38] sm:$0xf]
        %v276 = vld [vmem:[%s211 + $0x3c] sm:$0xf]
        %v277 = vld [vmem:[%s211 + $0x40] sm:$0xf]
        %v278 = vld [vmem:[%s211 + $0x44] sm:$0xf]
        %v279 = vld [vmem:[%s211 + $0x48] sm:$0xf]
        %v280 = vld [vmem:[%s211 + $0x4c] sm:$0xf]
        %v281 = vld [vmem:[%s211 + $0x50] sm:$0xf]
        %v282 = vld [vmem:[%s211 + $0x54] sm:$0xf]
        %v283 = vld [vmem:[%s211 + $0x58] sm:$0xf]
        %v284 = vld [vmem:[%s211 + $0x5c] sm:$0xf]
        %v285 = vld [vmem:[%s211 + $0x60] sm:$0xf]
        %v286 = vld [vmem:[%s211 + $0x64] sm:$0xf]
        %v287 = vld [vmem:[%s211 + $0x68] sm:$0xf]
        %v288 = vld [vmem:[%s211 + $0x6c] sm:$0xf]
        %v289 = vld [vmem:[%s211 + $0x70] sm:$0xf]
        %v290 = vld [vmem:[%s211 + $0x74] sm:$0xf]
        %v291 = vld [vmem:[%s211 + $0x78] sm:$0xf]
        %v292 = vld [vmem:[%s211 + $0x7c] sm:$0xf]
        %v293 = vld [vmem:[%s211 + $0x80] sm:$0xf]
        %v294 = vld [vmem:[%s211 + $0x84] sm:$0xf]
        %v295 = vld [vmem:[%s211 + $0x88] sm:$0xf]
        %v296 = vld [vmem:[%s211 + $0x8c] sm:$0xf]
        %v297 = vld [vmem:[%s211 + $0x90] sm:$0xf]
        %v298 = vld [vmem:[%s211 + $0x94] sm:$0xf]
        %v299 = vld [vmem:[%s211 + $0x98] sm:$0xf]
        %v300 = vld [vmem:[%s211 + $0x9c] sm:$0xf]
        %v301 = vld [vmem:[%s211 + $0xa0] sm:$0xf]
        %v302 = vld [vmem:[%s211 + $0xa4] sm:$0xf]
        %v303 = vld [vmem:[%s211 + $0xa8] sm:$0xf]
        %v304 = vld [vmem:[%s211 + $0xac] sm:$0xf]
        %v305 = vld [vmem:[%s211 + $0xb0] sm:$0xf]
        %v306 = vld [vmem:[%s211 + $0xb4] sm:$0xf]
        %v307 = vld [vmem:[%s211 + $0xb8] sm:$0xf]
        %v308 = vld [vmem:[%s211 + $0xbc] sm:$0xf]
        %v309 = vld [vmem:[%s211 + $0xc0] sm:$0xf]
        %v310 = vld [vmem:[%s211 + $0xc4] sm:$0xf]
        %v311 = vld [vmem:[%s211 + $0xc8] sm:$0xf]
        %v312 = vld [vmem:[%s211 + $0xcc] sm:$0xf]
        %v313 = vld [vmem:[%s211 + $0xd0] sm:$0xf]
        %v314 = vld [vmem:[%s211 + $0xd4] sm:$0xf]
        %v315 = vld [vmem:[%s211 + $0xd8] sm:$0xf]
        %v316 = vld [vmem:[%s211 + $0xdc] sm:$0xf]
        %v317 = vld [vmem:[%s211 + $0xe0] sm:$0xf]
        %v318 = vld [vmem:[%s211 + $0xe4] sm:$0xf]
        %v319 = vld [vmem:[%s211 + $0xe8] sm:$0xf]
        %v320 = vld [vmem:[%s211 + $0xec] sm:$0xf]
        %v321 = vld [vmem:[%s211 + $0xf0] sm:$0xf]
        %v322 = vld [vmem:[%s211 + $0xf4] sm:$0xf]
        %v323 = vld [vmem:[%s211 + $0xf8] sm:$0xf]
        %v324 = vld [vmem:[%s211 + $0xfc] sm:$0xf]
        %v325 = vld [vmem:[%s211 + $0x100] sm:$0xf]
        %v326 = vld [vmem:[%s211 + $0x104] sm:$0xf]
        %v327 = vld [vmem:[%s211 + $0x108] sm:$0xf]
        %v328 = vld [vmem:[%s211 + $0x10c] sm:$0xf]
        %v329 = vld [vmem:[%s211 + $0x110] sm:$0xf]
        %v330 = vld [vmem:[%s211 + $0x114] sm:$0xf]
        %v331 = vld [vmem:[%s211 + $0x118] sm:$0xf]
        %v332 = vld [vmem:[%s211 + $0x11c] sm:$0xf]
        %v333 = vld [vmem:[%s211 + $0x120] sm:$0xf]
        %v334 = vld [vmem:[%s211 + $0x124] sm:$0xf]
        %v335 = vld [vmem:[%s211 + $0x128] sm:$0xf]
        %v336 = vld [vmem:[%s211 + $0x12c] sm:$0xf]
        %v337 = vld [vmem:[%s211 + $0x130] sm:$0xf]
        %v338 = vld [vmem:[%s211 + $0x134] sm:$0xf]
        %v339 = vld [vmem:[%s211 + $0x138] sm:$0xf]
        %v340 = vld [vmem:[%s211 + $0x13c] sm:$0xf]
        %v341 = vld [vmem:[%s211 + $0x140] sm:$0xf]
        %v342 = vld [vmem:[%s211 + $0x144] sm:$0xf]
        %v343 = vld [vmem:[%s211 + $0x148] sm:$0xf]
        %v344 = vld [vmem:[%s211 + $0x14c] sm:$0xf]
        %v345 = vld [vmem:[%s211 + $0x150] sm:$0xf]
        %v346 = vld [vmem:[%s211 + $0x154] sm:$0xf]
        %v347 = vld [vmem:[%s211 + $0x158] sm:$0xf]
        %v348 = vld [vmem:[%s211 + $0x15c] sm:$0xf]
        %v349 = vld [vmem:[%s211 + $0x160] sm:$0xf]
        %v350 = vld [vmem:[%s211 + $0x164] sm:$0xf]
        %v351 = vld [vmem:[%s211 + $0x168] sm:$0xf]
        %v352 = vld [vmem:[%s211 + $0x16c] sm:$0xf]
        %v353 = vld [vmem:[%s211 + $0x170] sm:$0xf]
        %v354 = vld [vmem:[%s211 + $0x174] sm:$0xf]
        %v355 = vld [vmem:[%s211 + $0x178] sm:$0xf]
        %v356 = vld [vmem:[%s211 + $0x17c] sm:$0xf]
        %v453 = vunpack.c.l.b16 %v261
        %v454 = vunpack.c.l.b16 %v262
        %v455 = vunpack.c.l.b16 %v263
        %v456 = vunpack.c.l.b16 %v264
        %v457 = vunpack.c.l.b16 %v265
        %v458 = vunpack.c.l.b16 %v266
        %v459 = vunpack.c.l.b16 %v267
        %v460 = vunpack.c.l.b16 %v268
        %v461 = vunpack.c.l.b16 %v269
        %v462 = vunpack.c.l.b16 %v270
        %v463 = vunpack.c.l.b16 %v271
        %v464 = vunpack.c.l.b16 %v272
        %v465 = vunpack.c.l.b16 %v273
        %v466 = vunpack.c.l.b16 %v274
        %v467 = vunpack.c.l.b16 %v275
        %v468 = vunpack.c.l.b16 %v276
        %v469 = vunpack.c.l.b16 %v277
        %v470 = vunpack.c.l.b16 %v278
        %v471 = vunpack.c.l.b16 %v279
        %v472 = vunpack.c.l.b16 %v280
        %v473 = vunpack.c.l.b16 %v281
        %v474 = vunpack.c.l.b16 %v282
        %v475 = vunpack.c.l.b16 %v283
        %v476 = vunpack.c.l.b16 %v284
        %v477 = vunpack.c.l.b16 %v285
        %v478 = vunpack.c.l.b16 %v286
        %v479 = vunpack.c.l.b16 %v287
        %v480 = vunpack.c.l.b16 %v288
        %v481 = vunpack.c.l.b16 %v289
        %v482 = vunpack.c.l.b16 %v290
        %v483 = vunpack.c.l.b16 %v291
        %v484 = vunpack.c.l.b16 %v292
        %v485 = vunpack.c.l.b16 %v293
        %v486 = vunpack.c.l.b16 %v294
        %v487 = vunpack.c.l.b16 %v295
        %v488 = vunpack.c.l.b16 %v296
        %v489 = vunpack.c.l.b16 %v297
        %v490 = vunpack.c.l.b16 %v298
        %v491 = vunpack.c.l.b16 %v299
        %v492 = vunpack.c.l.b16 %v300
        %v493 = vunpack.c.l.b16 %v301
        %v494 = vunpack.c.l.b16 %v302
        %v495 = vunpack.c.l.b16 %v303
        %v496 = vunpack.c.l.b16 %v304
        %v497 = vunpack.c.l.b16 %v305
        %v498 = vunpack.c.l.b16 %v306
        %v499 = vunpack.c.l.b16 %v307
        %v500 = vunpack.c.l.b16 %v308
        %v501 = vunpack.c.l.b16 %v309
        %v502 = vunpack.c.l.b16 %v310
        %v503 = vunpack.c.l.b16 %v311
        %v504 = vunpack.c.l.b16 %v312
        %v505 = vunpack.c.l.b16 %v313
        %v506 = vunpack.c.l.b16 %v314
        %v507 = vunpack.c.l.b16 %v315
        %v508 = vunpack.c.l.b16 %v316
        %v509 = vunpack.c.l.b16 %v317
        %v510 = vunpack.c.l.b16 %v318
        %v511 = vunpack.c.l.b16 %v319
        %v512 = vunpack.c.l.b16 %v320
        %v513 = vunpack.c.l.b16 %v321
        %v514 = vunpack.c.l.b16 %v322
        %v515 = vunpack.c.l.b16 %v323
        %v516 = vunpack.c.l.b16 %v324
        %v517 = vunpack.c.l.b16 %v325
        %v518 = vunpack.c.l.b16 %v326
        %v519 = vunpack.c.l.b16 %v327
        %v520 = vunpack.c.l.b16 %v328
        %v521 = vunpack.c.l.b16 %v329
        %v522 = vunpack.c.l.b16 %v330
        %v523 = vunpack.c.l.b16 %v331
        %v524 = vunpack.c.l.b16 %v332
        %v525 = vunpack.c.l.b16 %v333
        %v526 = vunpack.c.l.b16 %v334
        %v527 = vunpack.c.l.b16 %v335
        %v528 = vunpack.c.l.b16 %v336
        %v529 = vunpack.c.l.b16 %v337
        %v530 = vunpack.c.l.b16 %v338
        %v531 = vunpack.c.l.b16 %v339
        %v532 = vunpack.c.l.b16 %v340
        %v533 = vunpack.c.l.b16 %v341
        %v534 = vunpack.c.l.b16 %v342
        %v535 = vunpack.c.l.b16 %v343
        %v536 = vunpack.c.l.b16 %v344
        %v537 = vunpack.c.l.b16 %v345
        %v538 = vunpack.c.l.b16 %v346
        %v539 = vunpack.c.l.b16 %v347
        %v540 = vunpack.c.l.b16 %v348
        %v541 = vunpack.c.l.b16 %v349
        %v542 = vunpack.c.l.b16 %v350
        %v543 = vunpack.c.l.b16 %v351
        %v544 = vunpack.c.l.b16 %v352
        %v545 = vunpack.c.l.b16 %v353
        %v546 = vunpack.c.l.b16 %v354
        %v547 = vunpack.c.l.b16 %v355
        %v548 = vunpack.c.l.b16 %v356
        %v549 = vpack.c.b16 %v454, %v453
        %v550 = vpack.c.b16 %v456, %v455
        %v551 = vpack.c.b16 %v458, %v457
        %v552 = vpack.c.b16 %v460, %v459
        %v553 = vpack.c.b16 %v462, %v461
        %v554 = vpack.c.b16 %v464, %v463
        %v555 = vpack.c.b16 %v466, %v465
        %v556 = vpack.c.b16 %v468, %v467
        %v557 = vpack.c.b16 %v470, %v469
        %v558 = vpack.c.b16 %v472, %v471
        %v559 = vpack.c.b16 %v474, %v473
        %v560 = vpack.c.b16 %v476, %v475
        %v561 = vpack.c.b16 %v478, %v477
        %v562 = vpack.c.b16 %v480, %v479
        %v563 = vpack.c.b16 %v482, %v481
        %v564 = vpack.c.b16 %v484, %v483
        %v565 = vpack.c.b16 %v486, %v485
        %v566 = vpack.c.b16 %v488, %v487
        %v567 = vpack.c.b16 %v490, %v489
        %v568 = vpack.c.b16 %v492, %v491
        %v569 = vpack.c.b16 %v494, %v493
        %v570 = vpack.c.b16 %v496, %v495
        %v571 = vpack.c.b16 %v498, %v497
        %v572 = vpack.c.b16 %v500, %v499
        %v573 = vpack.c.b16 %v502, %v501
        %v574 = vpack.c.b16 %v504, %v503
        %v575 = vpack.c.b16 %v506, %v505
        %v576 = vpack.c.b16 %v508, %v507
        %v577 = vpack.c.b16 %v510, %v509
        %v578 = vpack.c.b16 %v512, %v511
        %v579 = vpack.c.b16 %v514, %v513
        %v580 = vpack.c.b16 %v516, %v515
        %v581 = vpack.c.b16 %v518, %v517
        %v582 = vpack.c.b16 %v520, %v519
        %v583 = vpack.c.b16 %v522, %v521
        %v584 = vpack.c.b16 %v524, %v523
        %v585 = vpack.c.b16 %v526, %v525
        %v586 = vpack.c.b16 %v528, %v527
        %v587 = vpack.c.b16 %v530, %v529
        %v588 = vpack.c.b16 %v532, %v531
        %v589 = vpack.c.b16 %v534, %v533
        %v590 = vpack.c.b16 %v536, %v535
        %v591 = vpack.c.b16 %v538, %v537
        %v592 = vpack.c.b16 %v540, %v539
        %v593 = vpack.c.b16 %v542, %v541
        %v594 = vpack.c.b16 %v544, %v543
        %v595 = vpack.c.b16 %v546, %v545
        %v596 = vpack.c.b16 %v548, %v547
        %645 = vmatprep.subr.bf16.mxu0 0
        %646 = vmatpush1.bf16.msra.mxu0 %v556
        %647 = vmatprep.subr.bf16.mxu0 0
        %648 = vmatpush1.bf16.msra.mxu0 %v555
        %649 = vmatprep.subr.bf16.mxu0 0
        %650 = vmatpush1.bf16.msra.mxu0 %v554
        %651 = vmatprep.subr.bf16.mxu0 0
        %652 = vmatpush1.bf16.msra.mxu0 %v553
        %653 = vmatprep.subr.bf16.mxu0 0
        %654 = vmatpush1.bf16.msra.mxu0 %v552
        %655 = vmatprep.subr.bf16.mxu0 0
        %656 = vmatpush1.bf16.msra.mxu0 %v551
        %657 = vmatprep.subr.bf16.mxu0 0
        %658 = vmatpush1.bf16.msra.mxu0 %v550
        %659 = vmatprep.subr.bf16.mxu0 0
        %660 = vmatpush1.bf16.msra.mxu0 %v549
        %661 = vmatprep.subr.bf16.mxu0 0
        %662 = vmatpush2.bf16.msra.mxu0 %v564
        %663 = vmatprep.subr.bf16.mxu0 0
        %664 = vmatpush2.bf16.msra.mxu0 %v563
        %665 = vmatprep.subr.bf16.mxu0 0
        %666 = vmatpush2.bf16.msra.mxu0 %v562
        %667 = vmatprep.subr.bf16.mxu0 0
        %668 = vmatpush2.bf16.msra.mxu0 %v561
        %669 = vmatprep.subr.bf16.mxu0 0
        %670 = vmatpush2.bf16.msra.mxu0 %v560
        %671 = vmatprep.subr.bf16.mxu0 0
        %672 = vmatpush2.bf16.msra.mxu0 %v559
        %673 = vmatprep.subr.bf16.mxu0 0
        %674 = vmatpush2.bf16.msra.mxu0 %v558
        %675 = vmatprep.subr.bf16.mxu0 0
        %676 = vmatpush2.bf16.msra.mxu0 %v557
        %677 = vmatprep.mubr.bf16.mxu0 %v256
        %678 = vmatmul.mubr.bf16.gmra.mxu0 %v255
        %v679 = vpop.f32.mrf.mxu0
        %v680 = vadd.f32 0.0, %v679
        %v681 = vpop.f32.mrf.mxu0
        %v682 = vpop.f32.mrf.mxu0
        %v683 = vpop.f32.mrf.mxu0
        %684 = vdwg.mxu0
        %685 = vmatprep.subr.bf16.mxu0 0
        %686 = vmatpush1.bf16.msra.mxu0 %v572
        %687 = vmatprep.subr.bf16.mxu0 0
        %688 = vmatpush1.bf16.msra.mxu0 %v571
        %689 = vmatprep.subr.bf16.mxu0 0
        %690 = vmatpush1.bf16.msra.mxu0 %v570
        %691 = vmatprep.subr.bf16.mxu0 0
        %692 = vmatpush1.bf16.msra.mxu0 %v569
        %693 = vmatprep.subr.bf16.mxu0 0
        %694 = vmatpush1.bf16.msra.mxu0 %v568
        %695 = vmatprep.subr.bf16.mxu0 0
        %696 = vmatpush1.bf16.msra.mxu0 %v567
        %697 = vmatprep.subr.bf16.mxu0 0
        %698 = vmatpush1.bf16.msra.mxu0 %v566
        %699 = vmatprep.subr.bf16.mxu0 0
        %700 = vmatpush1.bf16.msra.mxu0 %v565
        %701 = vmatprep.subr.bf16.mxu0 0
        %702 = vmatpush2.bf16.msra.mxu0 %v580
        %703 = vmatprep.subr.bf16.mxu0 0
        %704 = vmatpush2.bf16.msra.mxu0 %v579
        %705 = vmatprep.subr.bf16.mxu0 0
        %706 = vmatpush2.bf16.msra.mxu0 %v578
        %707 = vmatprep.subr.bf16.mxu0 0
        %708 = vmatpush2.bf16.msra.mxu0 %v577
        %709 = vmatprep.subr.bf16.mxu0 0
        %710 = vmatpush2.bf16.msra.mxu0 %v576
        %711 = vmatprep.subr.bf16.mxu0 0
        %712 = vmatpush2.bf16.msra.mxu0 %v575
        %713 = vmatprep.subr.bf16.mxu0 0
        %714 = vmatpush2.bf16.msra.mxu0 %v574
        %715 = vmatprep.subr.bf16.mxu0 0
        %716 = vmatpush2.bf16.msra.mxu0 %v573
        %717 = vmatprep.mubr.bf16.mxu0 %v258
        %718 = vmatmul.mubr.bf16.gmra.mxu0 %v257
        %v719 = vpop.f32.mrf.mxu0
        %v720 = vadd.f32 %v680, %v719
        %v721 = vpop.f32.mrf.mxu0
        %v722 = vpop.f32.mrf.mxu0
        %v723 = vpop.f32.mrf.mxu0
        %724 = vdwg.mxu0
        %725 = vmatprep.subr.bf16.mxu0 0
        %726 = vmatpush1.bf16.msra.mxu0 %v588
        %727 = vmatprep.subr.bf16.mxu0 0
        %728 = vmatpush1.bf16.msra.mxu0 %v587
        %729 = vmatprep.subr.bf16.mxu0 0
        %730 = vmatpush1.bf16.msra.mxu0 %v586
        %731 = vmatprep.subr.bf16.mxu0 0
        %732 = vmatpush1.bf16.msra.mxu0 %v585
        %733 = vmatprep.subr.bf16.mxu0 0
        %734 = vmatpush1.bf16.msra.mxu0 %v584
        %735 = vmatprep.subr.bf16.mxu0 0
        %736 = vmatpush1.bf16.msra.mxu0 %v583
        %737 = vmatprep.subr.bf16.mxu0 0
        %738 = vmatpush1.bf16.msra.mxu0 %v582
        %739 = vmatprep.subr.bf16.mxu0 0
        %740 = vmatpush1.bf16.msra.mxu0 %v581
        %741 = vmatprep.subr.bf16.mxu0 0
        %742 = vmatpush2.bf16.msra.mxu0 %v596
        %743 = vmatprep.subr.bf16.mxu0 0
        %744 = vmatpush2.bf16.msra.mxu0 %v595
        %745 = vmatprep.subr.bf16.mxu0 0
        %746 = vmatpush2.bf16.msra.mxu0 %v594
        %747 = vmatprep.subr.bf16.mxu0 0
        %748 = vmatpush2.bf16.msra.mxu0 %v593
        %749 = vmatprep.subr.bf16.mxu0 0
        %750 = vmatpush2.bf16.msra.mxu0 %v592
        %751 = vmatprep.subr.bf16.mxu0 0
        %752 = vmatpush2.bf16.msra.mxu0 %v591
        %753 = vmatprep.subr.bf16.mxu0 0
        %754 = vmatpush2.bf16.msra.mxu0 %v590
        %755 = vmatprep.subr.bf16.mxu0 0
        %756 = vmatpush2.bf16.msra.mxu0 %v589
        %757 = vmatprep.mubr.bf16.mxu0 %v260
        %758 = vmatmul.mubr.bf16.gmra.mxu0 %v259
        %v759 = vpop.f32.mrf.mxu0
        %v760 = vadd.f32 %v720, %v759
        %v761 = vpop.f32.mrf.mxu0
        %v762 = vpop.f32.mrf.mxu0
        %v763 = vpop.f32.mrf.mxu0
        %764 = vdwg.mxu0
        %v765 = vadd.f32 %v248, %v760
        %766 = vst [vmem:[%s236] sm:$0xff] %v765
        // Predicated region
        $region45: #{tpu_custom_call.1} parent=31 // pred_check
          %p767 = pneg %p243
        $region46: #{tpu_custom_call.1} parent=31 // pred_check_branch
          %769 = sbr.rel (%p767) target = $region48
        $region47: #{tpu_custom_call.1} parent=31 // pred_region
          %v770 = vld [vmem:[%s236] sm:$0xff]
          %v771 = vld [vmem:[%s241] sm:$0x1]
          %v773 = vlaneseq
          %v774 = vshrl.u32 %v773, 7
          %v775 = vsub.s32 0, %v774
          %v776 = vrot.slane %v771, %v775
          %v778 = vadd.f32 %v770, %v776
          %779 = vst [vmem:[%s236] sm:$0xff] %v778
        $region48: #{tpu_custom_call.1} parent=31 // pred_fallthru
          _
        %s780 = sand.u32 %s121, 1
        %s781 = scalar_lea.sflag [#allocation4], %s780
        %s782 = sand.u32 %s121, 1
        %s783 = smul.addr %s782, 8
        %s784 = scalar_lea.vmem [#allocation7], %s783
        // Predicated region
        $region49: #{tpu_custom_call.1} parent=31 // pred_check
          %p785 = pneg %p131
        $region50: #{tpu_custom_call.1} parent=31 // pred_check_branch
          %787 = sbr.rel (%p785) target = $region52
        $region51: #{tpu_custom_call.1} parent=31 // pred_region
          %s789 = ssub.s32 128, 128
          %790 = vsyncadd %s781, %s789
          %s791 = smul.addr %s25, 128
          %s792 = scalar_lea.hbm %s3, %s791
          %s794 = sshll.u32 %s784, 4
          %s795 = int_to_ptr.vmem [resolvable:$true] %s794
          %797 = dma.vmem_to_hbm [thread:$0]  %s795, 128, %s792, %s781
        $region52: #{tpu_custom_call.1} parent=31 // pred_fallthru
          _
      $region32: #{tpu_custom_call.1} parent=5 // pred_fallthru
        _
      %p798 = scmp.le.s32.totalorder 2, %s16
      // Predicated region
      $region53: #{tpu_custom_call.1} parent=5 // pred_check
        %p799 = pneg %p798
      $region54: #{tpu_custom_call.1} parent=5 // pred_check_branch
        %801 = sbr.rel (%p799) target = $region56
      $region55: #{tpu_custom_call.1} parent=5 // pred_region
        %s802 = ssub.s32 %s16, 2
        // Predicated region
        $region57: #{tpu_custom_call.1} parent=55 // pred_check
          %p803 = pneg %p137
        $region58: #{tpu_custom_call.1} parent=55 // pred_check_branch
          %805 = sbr.rel (%p803) target = $region60
        $region59: #{tpu_custom_call.1} parent=55 // pred_region
          %s806 = sand.u32 %s122, 1
          %s807 = scalar_lea.sflag [#allocation4], %s806
          %s808 = sand.u32 %s122, 1
          %s809 = smul.addr %s808, 8
          %s810 = scalar_lea.vmem [#allocation7], %s809
          %811 = dma.done %s807, 128
        $region60: #{tpu_custom_call.1} parent=55 // pred_fallthru
          _
      $region56: #{tpu_custom_call.1} parent=5 // pred_fallthru
        _
    $region6: #{tpu_custom_call.1} parent=1 // loop_footer
      %s20 = sadd.s32 1, %s16
    $region7: #{tpu_custom_call.1} parent=1 // loop_footer_branch
      %15 = sbr.rel target = $region3
    $region8: #{tpu_custom_call.1} parent=1 // loop_exit
      _
    %812 = vsyncpa [#allocation3], 1
    %s813 = scalar_lea.sflag [#allocation3], 1
    %814 = vsyncpa %s813, 1
    %815 = vsyncpa [#allocation6], 1
    %s816 = scalar_lea.sflag [#allocation6], 1
    %817 = vsyncpa %s816, 1
    %818 = vsyncpa [#allocation4], 1
    %s819 = scalar_lea.sflag [#allocation4], 1
    %820 = vsyncpa %s819, 1

</llo_original>
